<compile_context>
chip_gen: v5e
topology: v5e:2x2
jax: 0.10.0
libtpu: 0.0.40
codegen_flags: <defaults>
</compile_context>

<pallas_src>
import functools

import jax
import jax.numpy as jnp
import numpy as np
from jax.experimental import pallas as pl
from jax.experimental.pallas import tpu as pltpu

EPS = 1e-5


# ----------------------------- Pallas kernels -------------------------------
# Layout inside the kernel: x block is (Cin, TM) with TM = flattened spatial lanes.
# A folded 1x1 conv+BN is  W (Cout,Cin) @ x (Cin,TM) + b (Cout,1).

def _fused_residual_block_down_kernel(x_ref,
                                      w11_ref, b11_ref, w12_ref, b12_ref,
                                      w21_ref, b21_ref, w22_ref, b22_ref,
                                      wd_ref, bd_ref, o_ref):
    x = x_ref[...]                                                   # (c0, TM)

    # --- BasicBlock 1 (in -> in), identity residual ---
    h = jnp.dot(w11_ref[...], x, preferred_element_type=jnp.float32) + b11_ref[...]
    h = jnp.maximum(h, 0.0)
    y = jnp.dot(w12_ref[...], h, preferred_element_type=jnp.float32) + b12_ref[...]
    x1 = jnp.maximum(y + x, 0.0)

    # --- BasicBlock 2 (in -> out) with downsample branch ---
    # (the stride-2 spatial subsample was applied to the raw input by the caller;
    #  it commutes with BasicBlock 1 because every conv here is 1x1 / pointwise)
    h2 = jnp.dot(w21_ref[...], x1, preferred_element_type=jnp.float32) + b21_ref[...]
    h2 = jnp.maximum(h2, 0.0)
    y2 = jnp.dot(w22_ref[...], h2, preferred_element_type=jnp.float32) + b22_ref[...]
    idn = jnp.dot(wd_ref[...], x1, preferred_element_type=jnp.float32) + bd_ref[...]
    o_ref[...] = jnp.maximum(y2 + idn, 0.0)                          # (c1, TM), lane-dense store


def _fused_residual_block_kernel(x_ref,
                                 w11_ref, b11_ref, w12_ref, b12_ref,
                                 w21_ref, b21_ref, w22_ref, b22_ref, o_ref):
    x = x_ref[...]                                                   # (c0, TM)

    # --- BasicBlock 1 (in -> in), identity residual ---
    h = jnp.dot(w11_ref[...], x, preferred_element_type=jnp.float32) + b11_ref[...]
    h = jnp.maximum(h, 0.0)
    y = jnp.dot(w12_ref[...], h, preferred_element_type=jnp.float32) + b12_ref[...]
    x1 = jnp.maximum(y + x, 0.0)

    # --- BasicBlock 2 (in -> in), identity residual (last=True) ---
    h2 = jnp.dot(w21_ref[...], x1, preferred_element_type=jnp.float32) + b21_ref[...]
    h2 = jnp.maximum(h2, 0.0)
    y2 = jnp.dot(w22_ref[...], h2, preferred_element_type=jnp.float32) + b22_ref[...]
    o_ref[...] = jnp.maximum(y2 + x1, 0.0)


def _pick_tm(n, m, c0, c1, budget_bytes=4 << 20):
    """Largest lane-tile that keeps double-buffered in+out within a VMEM budget."""
    per_lane = 2 * (c0 + c1) * 4                 # double-buffered f32 in + out, bytes/lane
    tm = max(128, (budget_bytes // per_lane) // 128 * 128)
    tm = min(tm, 8192)
    # megacore / v7x: keep >=2 grid programs when the batch axis is 1.
    if n == 1 and m > 2 * 128:
        tm = min(tm, pl.cdiv(pl.cdiv(m, 2), 128) * 128)
    return m if m <= tm else tm


def _run_fused(xf, ws, has_down):
    """xf: (N, Cin, M) f32 channels-first flattened-spatial. ws: folded weights/biases."""
    n, c0, m = xf.shape
    c1 = ws[4].shape[0]                           # w21: (c1, c0)
    tm = _pick_tm(n, m, c0, c1)
    grid = (n, pl.cdiv(m, tm))

    x_spec = pl.BlockSpec((None, c0, tm), lambda b, i: (b, 0, i))
    o_spec = pl.BlockSpec((None, c1, tm), lambda b, i: (b, 0, i))

    def _full(a):                                 # whole (tiny) weight/bias resident in VMEM
        return pl.BlockSpec(a.shape, lambda b, i, _nd=a.ndim: (0,) * _nd)

    in_specs = [x_spec] + [_full(a) for a in ws]
    kernel = _fused_residual_block_down_kernel if has_down else _fused_residual_block_kernel

    flops = 2 * n * m * (2 * c0 * c0 + c0 * c1 + c1 * c1 + (c0 * c1 if has_down else 0))
    bytes_accessed = 4 * (n * m * (c0 + c1) + int(sum(int(np.prod(a.shape)) for a in ws)))

    return pl.pallas_call(
        kernel,
        out_shape=jax.ShapeDtypeStruct((n, c1, m), jnp.float32),
        grid_spec=pltpu.PrefetchScalarGridSpec(
            num_scalar_prefetch=0,
            grid=grid,
            in_specs=in_specs,
            out_specs=o_spec,
        ),
        compiler_params=pltpu.CompilerParams(
            dimension_semantics=("parallel", "parallel"),
            vmem_limit_bytes=48 * 1024 * 1024,
        ),
        cost_estimate=pl.CostEstimate(
            flops=int(flops), transcendentals=0, bytes_accessed=int(bytes_accessed)),
    )(xf, *ws)


# --------------------------- parameter utilities ----------------------------

def _init_conv_bn(key, cin, cout):
    """Deterministic conv(1x1)+BN params (PyTorch shapes), BN in eval mode."""
    ks = jax.random.split(key, 6)
    conv_w = jax.random.normal(ks[0], (cout, cin, 1, 1), jnp.float32) * 0.1
    conv_b = jax.random.normal(ks[1], (cout,), jnp.float32) * 0.1
    gamma = 1.0 + 0.1 * jax.random.normal(ks[2], (cout,), jnp.float32)
    beta = 0.1 * jax.random.normal(ks[3], (cout,), jnp.float32)
    run_mean = 0.1 * jax.random.normal(ks[4], (cout,), jnp.float32)
    run_var = jnp.abs(1.0 + 0.1 * jax.random.normal(ks[5], (cout,), jnp.float32))
    return dict(conv_w=conv_w, conv_b=conv_b, gamma=gamma, beta=beta,
                mean=run_mean, var=run_var)


def _fold_conv_bn(p):
    """Fold BN (eval, running stats) into the 1x1 conv.
    Returns W (Cout, Cin) and b (Cout, 1) so the kernel computes W @ x + b."""
    s = p["gamma"] / jnp.sqrt(p["var"] + EPS)            # (Cout,)
    w = p["conv_w"][:, :, 0, 0] * s[:, None]             # (Cout, Cin)
    b = p["conv_b"] * s + p["beta"] - p["mean"] * s      # (Cout,)
    return w.astype(jnp.float32), b[:, None].astype(jnp.float32)


def init_residual_block_params(key, in_channel, out_channel, last=False):
    ks = jax.random.split(key, 6)
    params = {
        "fb_c1": _init_conv_bn(ks[0], in_channel, in_channel),
        "fb_c2": _init_conv_bn(ks[1], in_channel, in_channel),
    }
    if last:
        params["sb_c1"] = _init_conv_bn(ks[2], in_channel, in_channel)
        params["sb_c2"] = _init_conv_bn(ks[3], in_channel, in_channel)
        params["sb_down"] = None
    else:
        params["sb_c1"] = _init_conv_bn(ks[2], in_channel, out_channel)
        params["sb_c2"] = _init_conv_bn(ks[3], out_channel, out_channel)
        params["sb_down"] = _init_conv_bn(ks[4], in_channel, out_channel)
    return params


# ------------------------------ forward (glue) -------------------------------

@functools.partial(jax.jit, static_argnames=("last",))
def residual_block_forward(x_nchw, params, last=False):
    """x_nchw: (N, Cin, H, W) float32 -> (N, Cout, H', W') matching PyTorch."""
    x = x_nchw.astype(jnp.float32)
    n, c0, h, w = x.shape

    w11, b11 = _fold_conv_bn(params["fb_c1"])
    w12, b12 = _fold_conv_bn(params["fb_c2"])
    w21, b21 = _fold_conv_bn(params["sb_c1"])
    w22, b22 = _fold_conv_bn(params["sb_c2"])

    if not last:
        wd, bd = _fold_conv_bn(params["sb_down"])
        # The stride-2 1x1 convs of the second BasicBlock only read even (h, w)
        # positions, and the first BasicBlock is purely pointwise -> subsample the
        # raw input once and run the whole fused block on 1/4 of the pixels.
        x = x[:, :, ::2, ::2]
        h, w = x.shape[2], x.shape[3]
        ws = (w11, b11, w12, b12, w21, b21, w22, b22, wd, bd)
        has_down = True
    else:
        ws = (w11, b11, w12, b12, w21, b21, w22, b22)
        has_down = False

    m = h * w
    xf = x.reshape(n, c0, m)                      # free reshape: NCHW is already channels-first
    c1 = w21.shape[0]
    of = _run_fused(xf, ws, has_down)             # (N, Cout, M)
    return of.reshape(n, c1, h, w)                # free reshape back to NCHW


# ------------------------------ reference (JAX) ------------------------------

def _ref_conv_bn(x, p, stride=1):
    if stride > 1:
        x = x[:, :, ::stride, ::stride]
    w = p["conv_w"][:, :, 0, 0]                                   # (Cout, Cin)
    y = jnp.einsum("oc,nchw->nohw", w, x) + p["conv_b"][None, :, None, None]
    s = p["gamma"] / jnp.sqrt(p["var"] + EPS)
    return ((y - p["mean"][None, :, None, None]) * s[None, :, None, None]
            + p["beta"][None, :, None, None])


def _ref_basic_block(x, c1p, c2p, downp=None):
    stride = 2 if downp is not None else 1
    h = jnp.maximum(_ref_conv_bn(x, c1p, stride=stride), 0.0)
    y = _ref_conv_bn(h, c2p)
    idn = _ref_conv_bn(x, downp, stride=stride) if downp is not None else x
    return jnp.maximum(y + idn, 0.0)


def residual_block_reference(x_nchw, params):
    x = x_nchw.astype(jnp.float32)
    x = _ref_basic_block(x, params["fb_c1"], params["fb_c2"])
    x = _ref_basic_block(x, params["sb_c1"], params["sb_c2"], params["sb_down"])
    return x


# ----------------------------------- main ------------------------------------

if __name__ == "__main__":
    key = jax.random.PRNGKey(0)
    k_x, k_p1, k_p2 = jax.random.split(key, 3)

    in_channel, out_channel = 4, 8
    x = jax.random.normal(k_x, (2, in_channel, 16, 16), jnp.float32)   # NCHW

    # --- default ResidualBlock (second BasicBlock downsamples, stride 2) ---
    params = init_residual_block_params(k_p1, in_channel, out_channel, last=False)
    out = jax.block_until_ready(residual_block_forward(x, params, last=False))
    ref = jax.block_until_ready(residual_block_reference(x, params))
    assert out.shape == (2, out_channel, 8, 8), out.shape
    np.testing.assert_allclose(np.asarray(out), np.asarray(ref), rtol=1e-4, atol=1e-4)

    # --- last=True ResidualBlock (no downsample anywhere) ---
    params_l = init_residual_block_params(k_p2, in_channel, out_channel, last=True)
    out_l = jax.block_until_ready(residual_block_forward(x, params_l, last=True))
    ref_l = jax.block_until_ready(residual_block_reference(x, params_l))
    assert out_l.shape == (2, in_channel, 16, 16), out_l.shape
    np.testing.assert_allclose(np.asarray(out_l), np.asarray(ref_l), rtol=1e-4, atol=1e-4)

    print("KERNEL_OK")
</pallas_src>

<mosaic_0001>
module attributes {stable_mosaic.version = 11 : i64} {
  func.func @_fused_residual_block_down_kernel(%arg0: i32, %arg1: i32, %arg2: memref<1x4x64xf32, #tpu.memory_space<vmem>>, %arg3: memref<4x4xf32, #tpu.memory_space<vmem>>, %arg4: memref<4x1xf32, #tpu.memory_space<vmem>>, %arg5: memref<4x4xf32, #tpu.memory_space<vmem>>, %arg6: memref<4x1xf32, #tpu.memory_space<vmem>>, %arg7: memref<8x4xf32, #tpu.memory_space<vmem>>, %arg8: memref<8x1xf32, #tpu.memory_space<vmem>>, %arg9: memref<8x8xf32, #tpu.memory_space<vmem>>, %arg10: memref<8x1xf32, #tpu.memory_space<vmem>>, %arg11: memref<8x4xf32, #tpu.memory_space<vmem>>, %arg12: memref<8x1xf32, #tpu.memory_space<vmem>>, %arg13: memref<1x8x64xf32, #tpu.memory_space<vmem>>) attributes {dimension_semantics = [#tpu.dimension_semantics<parallel>, #tpu.dimension_semantics<parallel>], iteration_bounds = array<i64: 2, 1>, scalar_prefetch = 0 : i64, scratch_operands = 0 : i64, tpu.core_type = #tpu.core_type<tc>, window_params = [{transform_indices = @transform_0, window_bounds = array<i64: 1, 4, 64>}, {pipeline_mode = #tpu.pipeline_mode<synchronous>, transform_indices = @transform_1, window_bounds = array<i64: 4, 4>}, {pipeline_mode = #tpu.pipeline_mode<synchronous>, transform_indices = @transform_2, window_bounds = array<i64: 4, 1>}, {pipeline_mode = #tpu.pipeline_mode<synchronous>, transform_indices = @transform_3, window_bounds = array<i64: 4, 4>}, {pipeline_mode = #tpu.pipeline_mode<synchronous>, transform_indices = @transform_4, window_bounds = array<i64: 4, 1>}, {pipeline_mode = #tpu.pipeline_mode<synchronous>, transform_indices = @transform_5, window_bounds = array<i64: 8, 4>}, {pipeline_mode = #tpu.pipeline_mode<synchronous>, transform_indices = @transform_6, window_bounds = array<i64: 8, 1>}, {pipeline_mode = #tpu.pipeline_mode<synchronous>, transform_indices = @transform_7, window_bounds = array<i64: 8, 8>}, {pipeline_mode = #tpu.pipeline_mode<synchronous>, transform_indices = @transform_8, window_bounds = array<i64: 8, 1>}, {pipeline_mode = #tpu.pipeline_mode<synchronous>, transform_indices = @transform_9, window_bounds = array<i64: 8, 4>}, {pipeline_mode = #tpu.pipeline_mode<synchronous>, transform_indices = @transform_10, window_bounds = array<i64: 8, 1>}, {transform_indices = @transform_11, window_bounds = array<i64: 1, 8, 64>}]} {
    %c0 = arith.constant 0 : index
    %c0_0 = arith.constant 0 : index
    %c0_1 = arith.constant 0 : index
    %0 = vector.load %arg2[%c0, %c0_0, %c0_1] : memref<1x4x64xf32, #tpu.memory_space<vmem>>, vector<1x4x64xf32>
    %1 = vector.shape_cast %0 : vector<1x4x64xf32> to vector<4x64xf32>
    %c0_2 = arith.constant 0 : index
    %c0_3 = arith.constant 0 : index
    %2 = vector.load %arg3[%c0_2, %c0_3] : memref<4x4xf32, #tpu.memory_space<vmem>>, vector<4x4xf32>
    %cst = arith.constant dense<0.000000e+00> : vector<4x64xf32>
    %3 = tpu.matmul %2, %1, %cst {dimension_numbers = #tpu.dot_dimension_numbers<[1], [0], [0], [1], [0, 0, 1, 1], [], []>} : vector<4x4xf32>, vector<4x64xf32>, vector<4x64xf32> -> vector<4x64xf32>
    %c0_4 = arith.constant 0 : index
    %c0_5 = arith.constant 0 : index
    %4 = vector.load %arg4[%c0_4, %c0_5] : memref<4x1xf32, #tpu.memory_space<vmem>>, vector<4x1xf32>
    %5 = vector.broadcast %4 : vector<4x1xf32> to vector<4x64xf32>
    %6 = arith.addf %3, %5 : vector<4x64xf32>
    %cst_6 = arith.constant 0.000000e+00 : f32
    %7 = vector.broadcast %cst_6 : f32 to vector<4x64xf32>
    %8 = arith.maximumf %6, %7 : vector<4x64xf32>
    %c0_7 = arith.constant 0 : index
    %c0_8 = arith.constant 0 : index
    %9 = vector.load %arg5[%c0_7, %c0_8] : memref<4x4xf32, #tpu.memory_space<vmem>>, vector<4x4xf32>
    %cst_9 = arith.constant dense<0.000000e+00> : vector<4x64xf32>
    %10 = tpu.matmul %9, %8, %cst_9 {dimension_numbers = #tpu.dot_dimension_numbers<[1], [0], [0], [1], [0, 0, 1, 1], [], []>} : vector<4x4xf32>, vector<4x64xf32>, vector<4x64xf32> -> vector<4x64xf32>
    %c0_10 = arith.constant 0 : index
    %c0_11 = arith.constant 0 : index
    %11 = vector.load %arg6[%c0_10, %c0_11] : memref<4x1xf32, #tpu.memory_space<vmem>>, vector<4x1xf32>
    %12 = vector.broadcast %11 : vector<4x1xf32> to vector<4x64xf32>
    %13 = arith.addf %10, %12 : vector<4x64xf32>
    %14 = arith.addf %13, %1 : vector<4x64xf32>
    %cst_12 = arith.constant 0.000000e+00 : f32
    %15 = vector.broadcast %cst_12 : f32 to vector<4x64xf32>
    %16 = arith.maximumf %14, %15 : vector<4x64xf32>
    %c0_13 = arith.constant 0 : index
    %c0_14 = arith.constant 0 : index
    %17 = vector.load %arg7[%c0_13, %c0_14] : memref<8x4xf32, #tpu.memory_space<vmem>>, vector<8x4xf32>
    %cst_15 = arith.constant dense<0.000000e+00> : vector<8x64xf32>
    %18 = tpu.matmul %17, %16, %cst_15 {dimension_numbers = #tpu.dot_dimension_numbers<[1], [0], [0], [1], [0, 0, 1, 1], [], []>} : vector<8x4xf32>, vector<4x64xf32>, vector<8x64xf32> -> vector<8x64xf32>
    %c0_16 = arith.constant 0 : index
    %c0_17 = arith.constant 0 : index
    %19 = vector.load %arg8[%c0_16, %c0_17] : memref<8x1xf32, #tpu.memory_space<vmem>>, vector<8x1xf32>
    %20 = vector.broadcast %19 : vector<8x1xf32> to vector<8x64xf32>
    %21 = arith.addf %18, %20 : vector<8x64xf32>
    %cst_18 = arith.constant 0.000000e+00 : f32
    %22 = vector.broadcast %cst_18 : f32 to vector<8x64xf32>
    %23 = arith.maximumf %21, %22 : vector<8x64xf32>
    %c0_19 = arith.constant 0 : index
    %c0_20 = arith.constant 0 : index
    %24 = vector.load %arg9[%c0_19, %c0_20] : memref<8x8xf32, #tpu.memory_space<vmem>>, vector<8x8xf32>
    %cst_21 = arith.constant dense<0.000000e+00> : vector<8x64xf32>
    %25 = tpu.matmul %24, %23, %cst_21 {dimension_numbers = #tpu.dot_dimension_numbers<[1], [0], [0], [1], [0, 0, 1, 1], [], []>} : vector<8x8xf32>, vector<8x64xf32>, vector<8x64xf32> -> vector<8x64xf32>
    %c0_22 = arith.constant 0 : index
    %c0_23 = arith.constant 0 : index
    %26 = vector.load %arg10[%c0_22, %c0_23] : memref<8x1xf32, #tpu.memory_space<vmem>>, vector<8x1xf32>
    %27 = vector.broadcast %26 : vector<8x1xf32> to vector<8x64xf32>
    %28 = arith.addf %25, %27 : vector<8x64xf32>
    %c0_24 = arith.constant 0 : index
    %c0_25 = arith.constant 0 : index
    %29 = vector.load %arg11[%c0_24, %c0_25] : memref<8x4xf32, #tpu.memory_space<vmem>>, vector<8x4xf32>
    %cst_26 = arith.constant dense<0.000000e+00> : vector<8x64xf32>
    %30 = tpu.matmul %29, %16, %cst_26 {dimension_numbers = #tpu.dot_dimension_numbers<[1], [0], [0], [1], [0, 0, 1, 1], [], []>} : vector<8x4xf32>, vector<4x64xf32>, vector<8x64xf32> -> vector<8x64xf32>
    %c0_27 = arith.constant 0 : index
    %c0_28 = arith.constant 0 : index
    %31 = vector.load %arg12[%c0_27, %c0_28] : memref<8x1xf32, #tpu.memory_space<vmem>>, vector<8x1xf32>
    %32 = vector.broadcast %31 : vector<8x1xf32> to vector<8x64xf32>
    %33 = arith.addf %30, %32 : vector<8x64xf32>
    %34 = arith.addf %28, %33 : vector<8x64xf32>
    %cst_29 = arith.constant 0.000000e+00 : f32
    %35 = vector.broadcast %cst_29 : f32 to vector<8x64xf32>
    %36 = arith.maximumf %34, %35 : vector<8x64xf32>
    %c0_30 = arith.constant 0 : index
    %c0_31 = arith.constant 0 : index
    %c0_32 = arith.constant 0 : index
    %37 = vector.load %arg13[%c0_30, %c0_31, %c0_32] : memref<1x8x64xf32, #tpu.memory_space<vmem>>, vector<1x8x64xf32>
    %38 = vector.shape_cast %37 : vector<1x8x64xf32> to vector<8x64xf32>
    %39 = vector.shape_cast %36 : vector<8x64xf32> to vector<1x8x64xf32>
    tpu.vector_store %arg13[%c0_30, %c0_31, %c0_32], %39 {strides = array<i32>} : memref<1x8x64xf32, #tpu.memory_space<vmem>>, vector<1x8x64xf32>,
    return
  }
  func.func @transform_0(%arg0: i32, %arg1: i32) -> (i32, i32, i32) {
    %c0_i32 = arith.constant 0 : i32
    %c0_i32_0 = arith.constant 0 : i32
    return %arg0, %c0_i32, %arg1 : i32, i32, i32
  }
  func.func @transform_1(%arg0: i32, %arg1: i32) -> (i32, i32) {
    %c0_i32 = arith.constant 0 : i32
    %c0_i32_0 = arith.constant 0 : i32
    %c0_i32_1 = arith.constant 0 : i32
    return %c0_i32, %c0_i32_0 : i32, i32
  }
  func.func @transform_2(%arg0: i32, %arg1: i32) -> (i32, i32) {
    %c0_i32 = arith.constant 0 : i32
    %c0_i32_0 = arith.constant 0 : i32
    %c0_i32_1 = arith.constant 0 : i32
    return %c0_i32, %c0_i32_0 : i32, i32
  }
  func.func @transform_3(%arg0: i32, %arg1: i32) -> (i32, i32) {
    %c0_i32 = arith.constant 0 : i32
    %c0_i32_0 = arith.constant 0 : i32
    %c0_i32_1 = arith.constant 0 : i32
    return %c0_i32, %c0_i32_0 : i32, i32
  }
  func.func @transform_4(%arg0: i32, %arg1: i32) -> (i32, i32) {
    %c0_i32 = arith.constant 0 : i32
    %c0_i32_0 = arith.constant 0 : i32
    %c0_i32_1 = arith.constant 0 : i32
    return %c0_i32, %c0_i32_0 : i32, i32
  }
  func.func @transform_5(%arg0: i32, %arg1: i32) -> (i32, i32) {
    %c0_i32 = arith.constant 0 : i32
    %c0_i32_0 = arith.constant 0 : i32
    %c0_i32_1 = arith.constant 0 : i32
    return %c0_i32, %c0_i32_0 : i32, i32
  }
  func.func @transform_6(%arg0: i32, %arg1: i32) -> (i32, i32) {
    %c0_i32 = arith.constant 0 : i32
    %c0_i32_0 = arith.constant 0 : i32
    %c0_i32_1 = arith.constant 0 : i32
    return %c0_i32, %c0_i32_0 : i32, i32
  }
  func.func @transform_7(%arg0: i32, %arg1: i32) -> (i32, i32) {
    %c0_i32 = arith.constant 0 : i32
    %c0_i32_0 = arith.constant 0 : i32
    %c0_i32_1 = arith.constant 0 : i32
    return %c0_i32, %c0_i32_0 : i32, i32
  }
  func.func @transform_8(%arg0: i32, %arg1: i32) -> (i32, i32) {
    %c0_i32 = arith.constant 0 : i32
    %c0_i32_0 = arith.constant 0 : i32
    %c0_i32_1 = arith.constant 0 : i32
    return %c0_i32, %c0_i32_0 : i32, i32
  }
  func.func @transform_9(%arg0: i32, %arg1: i32) -> (i32, i32) {
    %c0_i32 = arith.constant 0 : i32
    %c0_i32_0 = arith.constant 0 : i32
    %c0_i32_1 = arith.constant 0 : i32
    return %c0_i32, %c0_i32_0 : i32, i32
  }
  func.func @transform_10(%arg0: i32, %arg1: i32) -> (i32, i32) {
    %c0_i32 = arith.constant 0 : i32
    %c0_i32_0 = arith.constant 0 : i32
    %c0_i32_1 = arith.constant 0 : i32
    return %c0_i32, %c0_i32_0 : i32, i32
  }
  func.func @transform_11(%arg0: i32, %arg1: i32) -> (i32, i32, i32) {
    %c0_i32 = arith.constant 0 : i32
    %c0_i32_0 = arith.constant 0 : i32
    return %arg0, %c0_i32, %arg1 : i32, i32, i32
  }
}

</mosaic_0001>

<llo_original>
// kernel: residual_block_forward.1
$region0: #{residual_block_forward.1}
  #allocation0 [shape = 'u32[]', space=smem, size = 0x4, offset = 0x4, fixed_abs, tag = 'smem constant byte address 0x4 - core index']
  #allocation1 [shape = 'u32[72,128]{1,0:T(1,128)}', space=vmem, size = 0x9000, scoped, tag = 'internal scratch']
  %s0 = inlined_call_operand.vmem [shape: f32[2,4,64], index: 0, kind: input, shape index: {}]
  %s1 = inlined_call_operand.vmem [shape: f32[4,4], index: 1, kind: input, shape index: {}]
  %s2 = inlined_call_operand.vmem [shape: f32[4,1], index: 2, kind: input, shape index: {}]
  %s3 = inlined_call_operand.vmem [shape: f32[4,4], index: 3, kind: input, shape index: {}]
  %s4 = inlined_call_operand.vmem [shape: f32[4,1], index: 4, kind: input, shape index: {}]
  %s5 = inlined_call_operand.vmem [shape: f32[8,4], index: 5, kind: input, shape index: {}]
  %s6 = inlined_call_operand.vmem [shape: f32[8,1], index: 6, kind: input, shape index: {}]
  %s7 = inlined_call_operand.vmem [shape: f32[8,8], index: 7, kind: input, shape index: {}]
  %s8 = inlined_call_operand.vmem [shape: f32[8,1], index: 8, kind: input, shape index: {}]
  %s9 = inlined_call_operand.vmem [shape: f32[8,4], index: 9, kind: input, shape index: {}]
  %s10 = inlined_call_operand.vmem [shape: f32[8,1], index: 10, kind: input, shape index: {}]
  %s11 = inlined_call_operand.vmem [shape: f32[2,8,64], index: 11, kind: output, shape index: {}]
  %s12 = sld [smem:[#allocation0]]
  $region77: #{residual_block_forward.1} parent=0
    _
  %s14 = ssub.s32 1, %s12
  %s15 = scalar_select 0, %s14, %s12
  loop: start=0, step=1, limit=4
  $region2: #{residual_block_forward.1} parent=0 // loop_pre_header
    _
  $region3: #{residual_block_forward.1} parent=0 // loop_header
    %s17 = sphi 0, %s21
    %p18 = scmp.ge.s32.totalorder %s17, 4
    %s24 = sphi 0, %s36
    %s25 = sphi 0, %s32
    %s26 = sphi 0, %s24
    %s27 = sphi 0, %s25
    %s28 = sphi 0, %s26
    %s29 = sphi 0, %s27
    %s41 = sphi 0, %s43
    %s44 = sphi 0, %s41
    %s45 = sphi 0, %s44
    %s61 = sphi 0, %s45
    %s65 = sphi 0, %s65
    %s67 = sphi 0, %s65
    %s68 = sphi 0, %s67
    %s82 = sphi 0, %s68
    %s86 = sphi 0, %s86
    %s88 = sphi 0, %s86
    %s89 = sphi 0, %s88
    %s103 = sphi 0, %s89
    %s107 = sphi 0, %s107
    %s109 = sphi 0, %s107
    %s110 = sphi 0, %s109
    %s124 = sphi 0, %s110
    %s128 = sphi 0, %s128
    %s130 = sphi 0, %s128
    %s131 = sphi 0, %s130
    %s145 = sphi 0, %s131
    %s149 = sphi 0, %s149
    %s151 = sphi 0, %s149
    %s152 = sphi 0, %s151
    %s166 = sphi 0, %s152
    %s170 = sphi 0, %s170
    %s172 = sphi 0, %s170
    %s173 = sphi 0, %s172
    %s187 = sphi 0, %s173
    %s191 = sphi 0, %s191
    %s193 = sphi 0, %s191
    %s194 = sphi 0, %s193
    %s208 = sphi 0, %s194
    %s212 = sphi 0, %s212
    %s214 = sphi 0, %s212
    %s215 = sphi 0, %s214
    %s229 = sphi 0, %s215
    %s233 = sphi 0, %s233
    %s235 = sphi 0, %s233
    %s236 = sphi 0, %s235
    %s250 = sphi 0, %s236
    %s254 = sphi 0, %s254
    %s256 = sphi 0, %s254
    %s257 = sphi 0, %s256
    %s271 = sphi 0, %s257
    %s279 = sphi 0, %s281
    %s282 = sphi 0, %s279
    %s283 = sphi 0, %s282
    %s299 = sphi 0, %s283
  $region4: #{residual_block_forward.1} parent=0 // loop_header_branch
    %20 = sbr.rel (%p18) target = $region8
  $region5: #{residual_block_forward.1} parent=0 // loop_body
    %s22 = ssub.s32 %s17, 1
    %s23 = ssub.s32 %s17, 2
    %s30 = sadd.s32 1, %s25
    %p31 = scmp.ge.s32.totalorder %s30, 1
    %s32 = scalar_select %p31, 0, %s30
    %s33 = sadd.s32 1, %s24
    %s34 = scalar_select %p31, %s33, %s24
    %p35 = scmp.ge.s32.totalorder %s34, 2
    %s36 = scalar_select %p35, 0, %s34
    %s37 = ssub.s32 %s24, %s36
    %s38 = ssub.s32 %s25, %s32
    %s39 = sor.u32 %s37, %s38
    %p40 = scmp.eq.s32.totalorder %s39, 0
    %s42 = sadd.s32 %s41, 1
    %s43 = scalar_select %p40, %s41, %s42
    %p46 = pneg %p40
    %p47 = scmp.eq.s32.totalorder %s17, 1
    %p48 = por %p46, %p47
    %p49 = scmp.ne.s32.totalorder %s41, %s44
    %p50 = scmp.eq.s32.totalorder %s17, 0
    %p51 = por %p49, %p50
    %p52 = scmp.ne.s32.totalorder %s41, %s44
    %p53 = scmp.eq.s32.totalorder %s22, 1
    %p54 = por %p52, %p53
    %p55 = scmp.ne.s32.totalorder %s44, %s45
    %p56 = scmp.eq.s32.totalorder %s22, 0
    %p57 = por %p55, %p56
    %p58 = scmp.ne.s32.totalorder %s44, %s45
    %p59 = scmp.eq.s32.totalorder %s23, 1
    %p60 = por %p58, %p59
    %p62 = scmp.ne.s32.totalorder %s45, %s61
    %p63 = scmp.eq.s32.totalorder %s23, 0
    %p64 = por %p62, %p63
    %s66 = sadd.s32 %s65, 1
    %p69 = scmp.eq.s32.totalorder %s17, 1
    %p70 = scmp.ne.s32.totalorder %s65, %s67
    %p71 = scmp.eq.s32.totalorder %s17, 0
    %p72 = por %p70, %p71
    %p73 = scmp.ne.s32.totalorder %s65, %s67
    %p74 = scmp.eq.s32.totalorder %s22, 1
    %p75 = por %p73, %p74
    %p76 = scmp.ne.s32.totalorder %s67, %s68
    %p77 = scmp.eq.s32.totalorder %s22, 0
    %p78 = por %p76, %p77
    %p79 = scmp.ne.s32.totalorder %s67, %s68
    %p80 = scmp.eq.s32.totalorder %s23, 1
    %p81 = por %p79, %p80
    %p83 = scmp.ne.s32.totalorder %s68, %s82
    %p84 = scmp.eq.s32.totalorder %s23, 0
    %p85 = por %p83, %p84
    %s87 = sadd.s32 %s86, 1
    %p90 = scmp.eq.s32.totalorder %s17, 1
    %p91 = scmp.ne.s32.totalorder %s86, %s88
    %p92 = scmp.eq.s32.totalorder %s17, 0
    %p93 = por %p91, %p92
    %p94 = scmp.ne.s32.totalorder %s86, %s88
    %p95 = scmp.eq.s32.totalorder %s22, 1
    %p96 = por %p94, %p95
    %p97 = scmp.ne.s32.totalorder %s88, %s89
    %p98 = scmp.eq.s32.totalorder %s22, 0
    %p99 = por %p97, %p98
    %p100 = scmp.ne.s32.totalorder %s88, %s89
    %p101 = scmp.eq.s32.totalorder %s23, 1
    %p102 = por %p100, %p101
    %p104 = scmp.ne.s32.totalorder %s89, %s103
    %p105 = scmp.eq.s32.totalorder %s23, 0
    %p106 = por %p104, %p105
    %s108 = sadd.s32 %s107, 1
    %p111 = scmp.eq.s32.totalorder %s17, 1
    %p112 = scmp.ne.s32.totalorder %s107, %s109
    %p113 = scmp.eq.s32.totalorder %s17, 0
    %p114 = por %p112, %p113
    %p115 = scmp.ne.s32.totalorder %s107, %s109
    %p116 = scmp.eq.s32.totalorder %s22, 1
    %p117 = por %p115, %p116
    %p118 = scmp.ne.s32.totalorder %s109, %s110
    %p119 = scmp.eq.s32.totalorder %s22, 0
    %p120 = por %p118, %p119
    %p121 = scmp.ne.s32.totalorder %s109, %s110
    %p122 = scmp.eq.s32.totalorder %s23, 1
    %p123 = por %p121, %p122
    %p125 = scmp.ne.s32.totalorder %s110, %s124
    %p126 = scmp.eq.s32.totalorder %s23, 0
    %p127 = por %p125, %p126
    %s129 = sadd.s32 %s128, 1
    %p132 = scmp.eq.s32.totalorder %s17, 1
    %p133 = scmp.ne.s32.totalorder %s128, %s130
    %p134 = scmp.eq.s32.totalorder %s17, 0
    %p135 = por %p133, %p134
    %p136 = scmp.ne.s32.totalorder %s128, %s130
    %p137 = scmp.eq.s32.totalorder %s22, 1
    %p138 = por %p136, %p137
    %p139 = scmp.ne.s32.totalorder %s130, %s131
    %p140 = scmp.eq.s32.totalorder %s22, 0
    %p141 = por %p139, %p140
    %p142 = scmp.ne.s32.totalorder %s130, %s131
    %p143 = scmp.eq.s32.totalorder %s23, 1
    %p144 = por %p142, %p143
    %p146 = scmp.ne.s32.totalorder %s131, %s145
    %p147 = scmp.eq.s32.totalorder %s23, 0
    %p148 = por %p146, %p147
    %s150 = sadd.s32 %s149, 1
    %p153 = scmp.eq.s32.totalorder %s17, 1
    %p154 = scmp.ne.s32.totalorder %s149, %s151
    %p155 = scmp.eq.s32.totalorder %s17, 0
    %p156 = por %p154, %p155
    %p157 = scmp.ne.s32.totalorder %s149, %s151
    %p158 = scmp.eq.s32.totalorder %s22, 1
    %p159 = por %p157, %p158
    %p160 = scmp.ne.s32.totalorder %s151, %s152
    %p161 = scmp.eq.s32.totalorder %s22, 0
    %p162 = por %p160, %p161
    %p163 = scmp.ne.s32.totalorder %s151, %s152
    %p164 = scmp.eq.s32.totalorder %s23, 1
    %p165 = por %p163, %p164
    %p167 = scmp.ne.s32.totalorder %s152, %s166
    %p168 = scmp.eq.s32.totalorder %s23, 0
    %p169 = por %p167, %p168
    %s171 = sadd.s32 %s170, 1
    %p174 = scmp.eq.s32.totalorder %s17, 1
    %p175 = scmp.ne.s32.totalorder %s170, %s172
    %p176 = scmp.eq.s32.totalorder %s17, 0
    %p177 = por %p175, %p176
    %p178 = scmp.ne.s32.totalorder %s170, %s172
    %p179 = scmp.eq.s32.totalorder %s22, 1
    %p180 = por %p178, %p179
    %p181 = scmp.ne.s32.totalorder %s172, %s173
    %p182 = scmp.eq.s32.totalorder %s22, 0
    %p183 = por %p181, %p182
    %p184 = scmp.ne.s32.totalorder %s172, %s173
    %p185 = scmp.eq.s32.totalorder %s23, 1
    %p186 = por %p184, %p185
    %p188 = scmp.ne.s32.totalorder %s173, %s187
    %p189 = scmp.eq.s32.totalorder %s23, 0
    %p190 = por %p188, %p189
    %s192 = sadd.s32 %s191, 1
    %p195 = scmp.eq.s32.totalorder %s17, 1
    %p196 = scmp.ne.s32.totalorder %s191, %s193
    %p197 = scmp.eq.s32.totalorder %s17, 0
    %p198 = por %p196, %p197
    %p199 = scmp.ne.s32.totalorder %s191, %s193
    %p200 = scmp.eq.s32.totalorder %s22, 1
    %p201 = por %p199, %p200
    %p202 = scmp.ne.s32.totalorder %s193, %s194
    %p203 = scmp.eq.s32.totalorder %s22, 0
    %p204 = por %p202, %p203
    %p205 = scmp.ne.s32.totalorder %s193, %s194
    %p206 = scmp.eq.s32.totalorder %s23, 1
    %p207 = por %p205, %p206
    %p209 = scmp.ne.s32.totalorder %s194, %s208
    %p210 = scmp.eq.s32.totalorder %s23, 0
    %p211 = por %p209, %p210
    %s213 = sadd.s32 %s212, 1
    %p216 = scmp.eq.s32.totalorder %s17, 1
    %p217 = scmp.ne.s32.totalorder %s212, %s214
    %p218 = scmp.eq.s32.totalorder %s17, 0
    %p219 = por %p217, %p218
    %p220 = scmp.ne.s32.totalorder %s212, %s214
    %p221 = scmp.eq.s32.totalorder %s22, 1
    %p222 = por %p220, %p221
    %p223 = scmp.ne.s32.totalorder %s214, %s215
    %p224 = scmp.eq.s32.totalorder %s22, 0
    %p225 = por %p223, %p224
    %p226 = scmp.ne.s32.totalorder %s214, %s215
    %p227 = scmp.eq.s32.totalorder %s23, 1
    %p228 = por %p226, %p227
    %p230 = scmp.ne.s32.totalorder %s215, %s229
    %p231 = scmp.eq.s32.totalorder %s23, 0
    %p232 = por %p230, %p231
    %s234 = sadd.s32 %s233, 1
    %p237 = scmp.eq.s32.totalorder %s17, 1
    %p238 = scmp.ne.s32.totalorder %s233, %s235
    %p239 = scmp.eq.s32.totalorder %s17, 0
    %p240 = por %p238, %p239
    %p241 = scmp.ne.s32.totalorder %s233, %s235
    %p242 = scmp.eq.s32.totalorder %s22, 1
    %p243 = por %p241, %p242
    %p244 = scmp.ne.s32.totalorder %s235, %s236
    %p245 = scmp.eq.s32.totalorder %s22, 0
    %p246 = por %p244, %p245
    %p247 = scmp.ne.s32.totalorder %s235, %s236
    %p248 = scmp.eq.s32.totalorder %s23, 1
    %p249 = por %p247, %p248
    %p251 = scmp.ne.s32.totalorder %s236, %s250
    %p252 = scmp.eq.s32.totalorder %s23, 0
    %p253 = por %p251, %p252
    %s255 = sadd.s32 %s254, 1
    %p258 = scmp.eq.s32.totalorder %s17, 1
    %p259 = scmp.ne.s32.totalorder %s254, %s256
    %p260 = scmp.eq.s32.totalorder %s17, 0
    %p261 = por %p259, %p260
    %p262 = scmp.ne.s32.totalorder %s254, %s256
    %p263 = scmp.eq.s32.totalorder %s22, 1
    %p264 = por %p262, %p263
    %p265 = scmp.ne.s32.totalorder %s256, %s257
    %p266 = scmp.eq.s32.totalorder %s22, 0
    %p267 = por %p265, %p266
    %p268 = scmp.ne.s32.totalorder %s256, %s257
    %p269 = scmp.eq.s32.totalorder %s23, 1
    %p270 = por %p268, %p269
    %p272 = scmp.ne.s32.totalorder %s257, %s271
    %p273 = scmp.eq.s32.totalorder %s23, 0
    %p274 = por %p272, %p273
    %s275 = ssub.s32 %s24, %s36
    %s276 = ssub.s32 %s25, %s32
    %s277 = sor.u32 %s275, %s276
    %p278 = scmp.eq.s32.totalorder %s277, 0
    %s280 = sadd.s32 %s279, 1
    %s281 = scalar_select %p278, %s279, %s280
    %p284 = pneg %p278
    %p285 = scmp.eq.s32.totalorder %s17, 1
    %p286 = por %p284, %p285
    %p287 = scmp.ne.s32.totalorder %s279, %s282
    %p288 = scmp.eq.s32.totalorder %s17, 0
    %p289 = por %p287, %p288
    %p290 = scmp.ne.s32.totalorder %s279, %s282
    %p291 = scmp.eq.s32.totalorder %s22, 1
    %p292 = por %p290, %p291
    %p293 = scmp.ne.s32.totalorder %s282, %s283
    %p294 = scmp.eq.s32.totalorder %s22, 0
    %p295 = por %p293, %p294
    %p296 = scmp.ne.s32.totalorder %s282, %s283
    %p297 = scmp.eq.s32.totalorder %s23, 1
    %p298 = por %p296, %p297
    %p300 = scmp.ne.s32.totalorder %s283, %s299
    %p301 = scmp.eq.s32.totalorder %s23, 0
    %p302 = por %p300, %p301
    %p303 = scmp.le.s32.totalorder 1, %s17
    %p304 = scmp.lt.s32.totalorder %s17, 3
    %p305 = pnand %p303, %p304
    %p306 = pneg %p305
    // Predicated region
    $region9: #{residual_block_forward.1} parent=5 // pred_check
      _
    $region10: #{residual_block_forward.1} parent=5 // pred_check_branch
      %308 = sbr.rel (%p305) target = $region12
    $region11: #{residual_block_forward.1} parent=5 // pred_region
      %s309 = ssub.s32 %s17, 1
      // Predicated region
      $region13: #{residual_block_forward.1} parent=11 // pred_check
        %p310 = pneg %p78
      $region14: #{residual_block_forward.1} parent=11 // pred_check_branch
        %312 = sbr.rel (%p310) target = $region16
      $region15: #{residual_block_forward.1} parent=11 // pred_region
        _
      $region16: #{residual_block_forward.1} parent=11 // pred_fallthru
        _
      // Predicated region
      $region17: #{residual_block_forward.1} parent=11 // pred_check
        %p313 = pneg %p99
      $region18: #{residual_block_forward.1} parent=11 // pred_check_branch
        %315 = sbr.rel (%p313) target = $region20
      $region19: #{residual_block_forward.1} parent=11 // pred_region
        _
      $region20: #{residual_block_forward.1} parent=11 // pred_fallthru
        _
      // Predicated region
      $region21: #{residual_block_forward.1} parent=11 // pred_check
        %p316 = pneg %p120
      $region22: #{residual_block_forward.1} parent=11 // pred_check_branch
        %318 = sbr.rel (%p316) target = $region24
      $region23: #{residual_block_forward.1} parent=11 // pred_region
        _
      $region24: #{residual_block_forward.1} parent=11 // pred_fallthru
        _
      // Predicated region
      $region25: #{residual_block_forward.1} parent=11 // pred_check
        %p319 = pneg %p141
      $region26: #{residual_block_forward.1} parent=11 // pred_check_branch
        %321 = sbr.rel (%p319) target = $region28
      $region27: #{residual_block_forward.1} parent=11 // pred_region
        _
      $region28: #{residual_block_forward.1} parent=11 // pred_fallthru
        _
      // Predicated region
      $region29: #{residual_block_forward.1} parent=11 // pred_check
        %p322 = pneg %p162
      $region30: #{residual_block_forward.1} parent=11 // pred_check_branch
        %324 = sbr.rel (%p322) target = $region32
      $region31: #{residual_block_forward.1} parent=11 // pred_region
        _
      $region32: #{residual_block_forward.1} parent=11 // pred_fallthru
        _
      // Predicated region
      $region33: #{residual_block_forward.1} parent=11 // pred_check
        %p325 = pneg %p183
      $region34: #{residual_block_forward.1} parent=11 // pred_check_branch
        %327 = sbr.rel (%p325) target = $region36
      $region35: #{residual_block_forward.1} parent=11 // pred_region
        _
      $region36: #{residual_block_forward.1} parent=11 // pred_fallthru
        _
      // Predicated region
      $region37: #{residual_block_forward.1} parent=11 // pred_check
        %p328 = pneg %p204
      $region38: #{residual_block_forward.1} parent=11 // pred_check_branch
        %330 = sbr.rel (%p328) target = $region40
      $region39: #{residual_block_forward.1} parent=11 // pred_region
        _
      $region40: #{residual_block_forward.1} parent=11 // pred_fallthru
        _
      // Predicated region
      $region41: #{residual_block_forward.1} parent=11 // pred_check
        %p331 = pneg %p225
      $region42: #{residual_block_forward.1} parent=11 // pred_check_branch
        %333 = sbr.rel (%p331) target = $region44
      $region43: #{residual_block_forward.1} parent=11 // pred_region
        _
      $region44: #{residual_block_forward.1} parent=11 // pred_fallthru
        _
      // Predicated region
      $region45: #{residual_block_forward.1} parent=11 // pred_check
        %p334 = pneg %p246
      $region46: #{residual_block_forward.1} parent=11 // pred_check_branch
        %336 = sbr.rel (%p334) target = $region48
      $region47: #{residual_block_forward.1} parent=11 // pred_region
        _
      $region48: #{residual_block_forward.1} parent=11 // pred_fallthru
        _
      // Predicated region
      $region49: #{residual_block_forward.1} parent=11 // pred_check
        %p337 = pneg %p267
      $region50: #{residual_block_forward.1} parent=11 // pred_check_branch
        %339 = sbr.rel (%p337) target = $region52
      $region51: #{residual_block_forward.1} parent=11 // pred_region
        _
      $region52: #{residual_block_forward.1} parent=11 // pred_fallthru
        _
    $region12: #{residual_block_forward.1} parent=5 // pred_fallthru
      _
    %p340 = scmp.lt.s32.totalorder %s17, 2
    // Predicated region
    $region53: #{residual_block_forward.1} parent=5 // pred_check
      %p341 = pneg %p340
    $region54: #{residual_block_forward.1} parent=5 // pred_check_branch
      %343 = sbr.rel (%p341) target = $region56
    $region55: #{residual_block_forward.1} parent=5 // pred_region
      // Predicated region
      $region57: #{residual_block_forward.1} parent=55 // pred_check
        %p344 = pneg %p51
      $region58: #{residual_block_forward.1} parent=55 // pred_check_branch
        %346 = sbr.rel (%p344) target = $region60
      $region59: #{residual_block_forward.1} parent=55 // pred_region
        %p347 = scmp.lt.s32.totalorder %s24, 1
        %s348 = scalar_select %p347, %s24, 1
        %p349 = scmp.lt.s32.totalorder %s25, 0
        %s350 = scalar_select %p349, %s25, 0
        %s351 = sadd.s32 %s350, %s348
        %s352 = smul.addr %s351, 4
        %s353 = scalar_lea.vmem %s0, %s352
      $region60: #{residual_block_forward.1} parent=55 // pred_fallthru
        _
    $region56: #{residual_block_forward.1} parent=5 // pred_fallthru
      _
    %p354 = scmp.le.s32.totalorder 1, %s17
    %p355 = scmp.lt.s32.totalorder %s17, 3
    %p356 = pnand %p354, %p355
    %p357 = pneg %p356
    // Predicated region
    $region61: #{residual_block_forward.1} parent=5 // pred_check
      _
    $region62: #{residual_block_forward.1} parent=5 // pred_check_branch
      %359 = sbr.rel (%p356) target = $region64
    $region63: #{residual_block_forward.1} parent=5 // pred_region
      %s360 = ssub.s32 %s17, 1
      %p361 = scmp.lt.s32.totalorder %s26, 1
      %s362 = scalar_select %p361, %s26, 1
      %p363 = scmp.lt.s32.totalorder %s27, 0
      %s364 = scalar_select %p363, %s27, 0
      %s365 = sadd.s32 %s364, %s362
      %s366 = smul.addr %s365, 4
      %s367 = scalar_lea.vmem %s0, %s366
      %p368 = pneg %p57
      %p369 = pneg %p54
      %p370 = pneg %p78
      %p371 = pneg %p75
      %p372 = pneg %p99
      %p373 = pneg %p96
      %p374 = pneg %p120
      %p375 = pneg %p117
      %p376 = pneg %p141
      %p377 = pneg %p138
      %p378 = pneg %p162
      %p379 = pneg %p159
      %p380 = pneg %p183
      %p381 = pneg %p180
      %p382 = pneg %p204
      %p383 = pneg %p201
      %p384 = pneg %p225
      %p385 = pneg %p222
      %p386 = pneg %p246
      %p387 = pneg %p243
      %p388 = pneg %p267
      %p389 = pneg %p264
      %p390 = pneg %p295
      %p391 = pneg %p292
      %p392 = scmp.lt.s32.totalorder %s26, 1
      %s393 = scalar_select %p392, %s26, 1
      %p394 = scmp.lt.s32.totalorder %s27, 0
      %s395 = scalar_select %p394, %s27, 0
      %s396 = sadd.s32 %s395, %s393
      %s397 = smul.addr %s396, 8
      %s398 = scalar_lea.vmem %s11, %s397
      %p399 = scmp.lt.s32.totalorder %s26, 1
      %s400 = scalar_select %p399, %s26, 1
      %p401 = scmp.lt.s32.totalorder %s27, 0
      %s402 = scalar_select %p401, %s27, 0
      %s403 = sadd.s32 %s402, %s400
      %s404 = smul.addr %s403, 4
      %s405 = scalar_lea.vmem %s0, %s404
      %p406 = scmp.lt.s32.totalorder %s26, 1
      %s407 = scalar_select %p406, %s26, 1
      %p408 = scmp.lt.s32.totalorder %s27, 0
      %s409 = scalar_select %p408, %s27, 0
      %s410 = sadd.s32 %s409, %s407
      %s411 = smul.addr %s410, 8
      %s412 = scalar_lea.vmem %s11, %s411
      %v413 = vld [vmem:[%s405] sm:$0xf]
      %v414 = vld [vmem:[%s1] sm:$0xf]
      %v415 = vld [vmem:[%s2] sm:$0xf]
      %417 = vset.pattern.permute.xlu0 0
      %418 = vperm.xlu0 %417, %v415
      %v419 = vpop.permute.xlu0 %418
      %vm421 = vcmask 31744
      %v423 = vsel %vm421, %v414, 0
      %vm425 = vcmask 1043456
      %v427 = vsel %vm425, %v413, 0
      %429 = vmatpush.msra.mxu0 0.0
      %430 = vmatpush.msra.mxu0 0.0
      %431 = vmatpush.msra.mxu0 0.0
      %432 = vmatpush.msra.mxu0 0.0
      %433 = vmatpush.msra.mxu0 0.0
      %434 = vmatpush.msra.mxu0 0.0
      %435 = vmatpush.msra.mxu0 0.0
      %436 = vmatpush.msra.mxu0 0.0
      %437 = vmatpush.msra.mxu0 0.0
      %438 = vmatpush.msra.mxu0 0.0
      %439 = vmatpush.msra.mxu0 0.0
      %440 = vmatpush.msra.mxu0 0.0
      %441 = vmatpush.msra.mxu0 0.0
      %442 = vmatpush.msra.mxu0 0.0
      %443 = vmatpush.msra.mxu0 0.0
      %444 = vmatpush.msra.mxu0 %v427
      %445 = vmatmul.f32.gmra.mxu0 %v423
      %v446 = vpop.f32.mrf.mxu0
      %v447 = vadd.f32 %v419, %v446
      %448 = vdwg.mxu0
      %v449 = vmax.f32 %v447, 0.0
      %v450 = vld [vmem:[%s3] sm:$0xf]
      %v451 = vld [vmem:[%s4] sm:$0xf]
      %453 = vset.pattern.permute.xlu0 0
      %454 = vperm.xlu0 %453, %v451
      %v455 = vpop.permute.xlu0 %454
      %v458 = vsel %vm421, %v450, 0
      %v461 = vsel %vm425, %v449, 0
      %463 = vmatpush.msra.mxu0 0.0
      %464 = vmatpush.msra.mxu0 0.0
      %465 = vmatpush.msra.mxu0 0.0
      %466 = vmatpush.msra.mxu0 0.0
      %467 = vmatpush.msra.mxu0 0.0
      %468 = vmatpush.msra.mxu0 0.0
      %469 = vmatpush.msra.mxu0 0.0
      %470 = vmatpush.msra.mxu0 0.0
      %471 = vmatpush.msra.mxu0 0.0
      %472 = vmatpush.msra.mxu0 0.0
      %473 = vmatpush.msra.mxu0 0.0
      %474 = vmatpush.msra.mxu0 0.0
      %475 = vmatpush.msra.mxu0 0.0
      %476 = vmatpush.msra.mxu0 0.0
      %477 = vmatpush.msra.mxu0 0.0
      %478 = vmatpush.msra.mxu0 %v461
      %479 = vmatmul.f32.gmra.mxu0 %v458
      %v480 = vpop.f32.mrf.mxu0
      %v481 = vadd.f32 %v455, %v480
      %482 = vdwg.mxu0
      %v483 = vadd.f32 %v481, %v413
      %v484 = vmax.f32 %v483, 0.0
      %v485 = vld [vmem:[%s5] sm:$0xff]
      %v486 = vld [vmem:[%s6] sm:$0xff]
      %488 = vset.pattern.permute.xlu0 0
      %489 = vperm.xlu0 %488, %v486
      %v490 = vpop.permute.xlu0 %489
      %v493 = vsel %vm421, %v485, 0
      %v496 = vsel %vm425, %v484, 0
      %498 = vmatpush.msra.mxu0 0.0
      %499 = vmatpush.msra.mxu0 0.0
      %500 = vmatpush.msra.mxu0 0.0
      %501 = vmatpush.msra.mxu0 0.0
      %502 = vmatpush.msra.mxu0 0.0
      %503 = vmatpush.msra.mxu0 0.0
      %504 = vmatpush.msra.mxu0 0.0
      %505 = vmatpush.msra.mxu0 0.0
      %506 = vmatpush.msra.mxu0 0.0
      %507 = vmatpush.msra.mxu0 0.0
      %508 = vmatpush.msra.mxu0 0.0
      %509 = vmatpush.msra.mxu0 0.0
      %510 = vmatpush.msra.mxu0 0.0
      %511 = vmatpush.msra.mxu0 0.0
      %512 = vmatpush.msra.mxu0 0.0
      %513 = vmatpush.msra.mxu0 %v496
      %514 = vmatmul.f32.gmra.mxu0 %v493
      %v515 = vpop.f32.mrf.mxu0
      %v516 = vadd.f32 %v490, %v515
      %517 = vdwg.mxu0
      %v518 = vmax.f32 %v516, 0.0
      %v519 = vld [vmem:[%s7] sm:$0xff]
      %v520 = vld [vmem:[%s8] sm:$0xff]
      %522 = vset.pattern.permute.xlu0 0
      %523 = vperm.xlu0 %522, %v520
      %v524 = vpop.permute.xlu0 %523
      %vm526 = vcmask 64512
      %v528 = vsel %vm526, %v519, 0
      %530 = vmatpush.msra.mxu0 0.0
      %531 = vmatpush.msra.mxu0 0.0
      %532 = vmatpush.msra.mxu0 0.0
      %533 = vmatpush.msra.mxu0 0.0
      %534 = vmatpush.msra.mxu0 0.0
      %535 = vmatpush.msra.mxu0 0.0
      %536 = vmatpush.msra.mxu0 0.0
      %537 = vmatpush.msra.mxu0 0.0
      %538 = vmatpush.msra.mxu0 0.0
      %539 = vmatpush.msra.mxu0 0.0
      %540 = vmatpush.msra.mxu0 0.0
      %541 = vmatpush.msra.mxu0 0.0
      %542 = vmatpush.msra.mxu0 0.0
      %543 = vmatpush.msra.mxu0 0.0
      %544 = vmatpush.msra.mxu0 0.0
      %545 = vmatpush.msra.mxu0 %v518
      %546 = vmatmul.f32.gmra.mxu0 %v528
      %v547 = vpop.f32.mrf.mxu0
      %v548 = vadd.f32 %v524, %v547
      %549 = vdwg.mxu0
      %v550 = vld [vmem:[%s9] sm:$0xff]
      %v551 = vld [vmem:[%s10] sm:$0xff]
      %553 = vset.pattern.permute.xlu0 0
      %554 = vperm.xlu0 %553, %v551
      %v555 = vpop.permute.xlu0 %554
      %v558 = vsel %vm421, %v550, 0
      %560 = vmatpush.msra.mxu0 0.0
      %561 = vmatpush.msra.mxu0 0.0
      %562 = vmatpush.msra.mxu0 0.0
      %563 = vmatpush.msra.mxu0 0.0
      %564 = vmatpush.msra.mxu0 0.0
      %565 = vmatpush.msra.mxu0 0.0
      %566 = vmatpush.msra.mxu0 0.0
      %567 = vmatpush.msra.mxu0 0.0
      %568 = vmatpush.msra.mxu0 0.0
      %569 = vmatpush.msra.mxu0 0.0
      %570 = vmatpush.msra.mxu0 0.0
      %571 = vmatpush.msra.mxu0 0.0
      %572 = vmatpush.msra.mxu0 0.0
      %573 = vmatpush.msra.mxu0 0.0
      %574 = vmatpush.msra.mxu0 0.0
      %575 = vmatpush.msra.mxu0 %v496
      %576 = vmatmul.f32.gmra.mxu0 %v558
      %v577 = vpop.f32.mrf.mxu0
      %v578 = vadd.f32 %v555, %v577
      %579 = vdwg.mxu0
      %v580 = vadd.f32 %v548, %v578
      %v581 = vmax.f32 %v580, 0.0
      %vm582 = vcmask 523264
      %583 = vst.msk [vmem:[%s412] sm:$0xff] %vm582, %v581
      %p584 = scmp.lt.s32.totalorder %s26, 1
      %s585 = scalar_select %p584, %s26, 1
      %p586 = scmp.lt.s32.totalorder %s27, 0
      %s587 = scalar_select %p586, %s27, 0
      %s588 = sadd.s32 %s587, %s585
      %s589 = smul.addr %s588, 8
      %s590 = scalar_lea.vmem %s11, %s589
      // Predicated region
      $region65: #{residual_block_forward.1} parent=63 // pred_check
        %p591 = pneg %p292
      $region66: #{residual_block_forward.1} parent=63 // pred_check_branch
        %593 = sbr.rel (%p591) target = $region68
      $region67: #{residual_block_forward.1} parent=63 // pred_region
        _
      $region68: #{residual_block_forward.1} parent=63 // pred_fallthru
        _
    $region64: #{residual_block_forward.1} parent=5 // pred_fallthru
      _
    %p594 = scmp.le.s32.totalorder 2, %s17
    // Predicated region
    $region69: #{residual_block_forward.1} parent=5 // pred_check
      %p595 = pneg %p594
    $region70: #{residual_block_forward.1} parent=5 // pred_check_branch
      %597 = sbr.rel (%p595) target = $region72
    $region71: #{residual_block_forward.1} parent=5 // pred_region
      %s598 = ssub.s32 %s17, 2
      // Predicated region
      $region73: #{residual_block_forward.1} parent=71 // pred_check
        %p599 = pneg %p298
      $region74: #{residual_block_forward.1} parent=71 // pred_check_branch
        %601 = sbr.rel (%p599) target = $region76
      $region75: #{residual_block_forward.1} parent=71 // pred_region
        %p602 = scmp.lt.s32.totalorder %s28, 1
        %s603 = scalar_select %p602, %s28, 1
        %p604 = scmp.lt.s32.totalorder %s29, 0
        %s605 = scalar_select %p604, %s29, 0
        %s606 = sadd.s32 %s605, %s603
        %s607 = smul.addr %s606, 8
        %s608 = scalar_lea.vmem %s11, %s607
      $region76: #{residual_block_forward.1} parent=71 // pred_fallthru
        _
    $region72: #{residual_block_forward.1} parent=5 // pred_fallthru
      _
  $region6: #{residual_block_forward.1} parent=0 // loop_footer
    %s21 = sadd.s32 1, %s17
  $region7: #{residual_block_forward.1} parent=0 // loop_footer_branch
    %16 = sbr.rel target = $region3
  $region8: #{residual_block_forward.1} parent=0 // loop_exit
    _

</llo_original>
